<compile_context>
chip_gen: v7x
topology: tpu7x:2x2x1
jax: 0.10.0
libtpu: 0.0.40
codegen_flags: <defaults>
</compile_context>

<pallas_src>
import random

import numpy as np
import jax
import jax.numpy as jnp
from jax import lax
from jax.experimental import pallas as pl
from jax.experimental.pallas import tpu as pltpu


def _round_up(x: int, m: int) -> int:
    return (x + m - 1) // m * m


# -----------------------------------------------------------------------------
# Fused forward kernel: decision -> smoothstep -> packed routing -> mixture.
# -----------------------------------------------------------------------------
def _make_fwd_kernel(gamma: float, n_leaves: int, n_slabs: int):
    cubic = -2.0 / gamma ** 3
    linear = 3.0 / (2.0 * gamma)
    half_g = gamma / 2.0

    def kernel(x_ref, w_ref, shift_ref, sel_ref, probs_ref, out_ref):
        # Decision logits for [s | 1-s | 1]: mask, Linear bias and BatchNorm
        # (full-batch stats) are pre-folded into w / shift on the host; the
        # negated weight copy yields the "1 - s" half for free because
        # smoothstep(-x) == 1 - smoothstep(x), and the constant column clamps
        # to exactly 1.0.  HIGHEST precision: tiny dot, 15x error amplification.
        zn = jnp.dot(x_ref[...], w_ref[...],
                     preferred_element_type=jnp.float32,
                     precision=lax.Precision.HIGHEST) + shift_ref[...]

        # smoothstep with hard clamps outside [-gamma/2, gamma/2]
        s = cubic * zn * zn * zn + linear * zn + 0.5
        s = jnp.where(zn <= -half_g, 0.0, s)
        s = jnp.where(zn >= half_g, 1.0, s)

        # Fused soft routing: one bf16 [TB, 2L+8] @ [2L+8, n_slabs*128] matmul.
        # Each selector column picks s, (1-s) or the exact constant 1.0, so no
        # elementwise offset add is needed and dead packed lanes are exactly 1.
        f = jnp.dot(s.astype(jnp.bfloat16), sel_ref[...],
                    preferred_element_type=jnp.float32)

        # Per-leaf product of the `depth` routing factors:
        #   1) multiply the 128-lane slabs together (vreg-aligned slices),
        #   2) roll-reduce the levels packed inside the slab (XLU slot).
        g = f[:, 0:128]
        for i in range(1, n_slabs):
            g = g * f[:, i * 128:(i + 1) * 128]
        step = 64
        while step >= n_leaves:
            g = g * pltpu.roll(g, shift=128 - step, axis=1)
            step //= 2
        # lanes [0, n_leaves) of g now hold mu; the remaining lanes hold
        # harmless finite products that the zero rows of probs annihilate.

        # Leaf mixture: probs = sigmoid(pi) (hoisted to the wrapper), zero
        # padded to the full 128-lane slab.
        out_ref[...] = jnp.dot(g, probs_ref[...],
                               preferred_element_type=jnp.float32)

    return kernel


# -----------------------------------------------------------------------------
# Wrapper
# -----------------------------------------------------------------------------
def neural_decision_tree_forward(x, params, *, gamma, depth,
                                 block_rows=1024, eps=1e-5):
    """params = (w_eff, b, bn_g, bn_b, sel_packed, pi)."""
    del depth  # layout is derived from the packed selector's shape
    w_eff, b, bn_g, bn_b, sel_packed, pi = params
    batch, n_feat = x.shape
    n_leaves = w_eff.shape[1]
    nd, packed_cols = sel_packed.shape
    n_slabs = packed_cols // 128
    pad_cols = nd - 2 * n_leaves
    c_out = pi.shape[1]

    # ---- BatchNorm training-mode statistics over the FULL batch (plain XLA).
    # The [B,F]@[F,L] dot + mean/var fuse trivially, run on both cores on v7x,
    # and use a centered variance.  HIGHEST precision because the smoothstep
    # slope 3/(2*gamma) amplifies any error in the statistics.
    z = jnp.dot(x, w_eff, precision=lax.Precision.HIGHEST) + b
    mean = jnp.mean(z, axis=0, keepdims=True)
    var = jnp.var(z, axis=0, keepdims=True)          # biased, BN training mode
    scale = bn_g * lax.rsqrt(var + eps)

    # Fold Linear bias + BatchNorm into the decision weights and build the
    # [s | 1-s | 1] producing layer:  zn2 = x @ w2 + shift2.
    w_scaled = w_eff * scale                                   # [F, L]
    shift = bn_b + (b - mean) * scale                          # [1, L]
    pad_w = jnp.zeros((n_feat, pad_cols), jnp.float32)
    pad_shift = jnp.zeros((1, pad_cols), jnp.float32).at[0, 0].set(gamma)
    w2 = jnp.concatenate([w_scaled, -w_scaled, pad_w], axis=1)       # [F, nd]
    shift2 = jnp.concatenate([shift, -shift, pad_shift], axis=1)     # [1, nd]
    # (column 2L: zn = gamma >= gamma/2 -> smoothstep clamps to exactly 1.0)

    # sigmoid(pi) hoisted out of the kernel; zero-padded to the 128-lane slab.
    probs_pad = jnp.zeros((128, c_out), jnp.float32)
    probs_pad = probs_pad.at[:n_leaves, :].set(jax.nn.sigmoid(pi))

    # ---- batch tiling: multiples of 8 sublanes.  The 1024-row default
    # amortizes the ~0.35us grid-step overhead; keep block_rows <= 2048 on v7x.
    tb = min(int(block_rows), _round_up(batch, 8))
    tb = _round_up(max(tb, 8), 8)
    padded = _round_up(batch, tb)
    xp = jnp.pad(x, ((0, padded - batch), (0, 0))) if padded != batch else x
    num_tiles = padded // tb

    tiled_rows = lambda i: (i, 0)   # batch-tiled operand
    resident = lambda i: (0, 0)     # weights stay resident in VMEM

    out = pl.pallas_call(
        _make_fwd_kernel(gamma, n_leaves, n_slabs),
        grid=(num_tiles,),
        in_specs=[
            pl.BlockSpec((tb, n_feat), tiled_rows),
            pl.BlockSpec((n_feat, nd), resident),
            pl.BlockSpec((1, nd), resident),
            pl.BlockSpec((nd, packed_cols), resident),
            pl.BlockSpec((128, c_out), resident),
        ],
        out_specs=pl.BlockSpec((tb, c_out), tiled_rows),
        out_shape=jax.ShapeDtypeStruct((padded, c_out), jnp.float32),
        compiler_params=pltpu.CompilerParams(
            dimension_semantics=("parallel",),   # megacore / v7x 2-TC sharding
            vmem_limit_bytes=32 * 1024 * 1024),
    )(xp, w2, shift2, sel_packed, probs_pad)
    return out[:batch]


# -----------------------------------------------------------------------------
# Parameter construction (deterministic, mirrors __init__ shapes)
# -----------------------------------------------------------------------------
def build_params(n_features, n_classes, depth, used_features_rate, seed=0):
    n_leaves = 2 ** depth
    if n_leaves > 128:
        raise NotImplementedError(
            "packed routing selector assumes n_leaves <= 128 (depth <= 7)")
    num_used = int(n_features * used_features_rate)
    per_slab = 128 // n_leaves               # levels packed per 128-lane slab
    n_slabs = -(-depth // per_slab)          # ceil(depth / per_slab)
    nd = 2 * n_leaves + 8                    # [s | 1-s | const-1 + pad]

    # used_features_mask: one_hot[sampled].T -> [n_features, num_used]
    random.seed(seed)
    idx = sorted(random.sample(range(n_features), num_used))
    mask = np.eye(n_features, dtype=np.float32)[idx].T

    key = jax.random.PRNGKey(seed)
    k_w, k_b, k_pi = jax.random.split(key, 3)
    bound = 1.0 / np.sqrt(num_used)
    # Linear(num_used -> n_leaves); stored transposed: [num_used, n_leaves]
    w = jax.random.uniform(k_w, (num_used, n_leaves), jnp.float32, -bound, bound)
    b = jax.random.uniform(k_b, (1, n_leaves), jnp.float32, -bound, bound)
    bn_g = jnp.ones((1, n_leaves), jnp.float32)
    bn_b = jnp.zeros((1, n_leaves), jnp.float32)
    pi_cols = 1 if n_classes == 2 else n_classes
    pi = jax.random.uniform(k_pi, (n_leaves, pi_cols), jnp.float32)  # torch.rand

    # Host-side, bit-exact fold of the one-hot mask into the decision weights:
    # w_eff[f, :] = w[u, :] if feature f is the u-th used feature, else 0.
    w_np = np.asarray(w)
    w_eff = np.zeros((n_features, n_leaves), np.float32)
    w_eff[np.asarray(idx), :] = w_np

    # Packed routing selector [nd, n_slabs*128] (bf16).  Column of (level k,
    # leaf l) sits at slab(k)*128 + (k % per_slab)*n_leaves + l and reads row
    # `node` (take s) or `n_leaves + node` (take 1-s); dead level positions
    # read the constant-1 decision column so they multiply as exactly 1.0.
    sel = np.zeros((nd, n_slabs * 128), np.float32)
    for k in range(n_slabs * per_slab):
        for l in range(n_leaves):
            col = (k // per_slab) * 128 + (k % per_slab) * n_leaves + l
            if k < depth:
                node = (1 << k) + (l >> (depth - k))
                bit = (l >> (depth - 1 - k)) & 1
                row = node if bit == 0 else n_leaves + node
            else:
                row = 2 * n_leaves        # constant-1 column
            sel[row, col] = 1.0

    raw = dict(mask=mask, w=w_np, b=np.asarray(b), pi=np.asarray(pi))
    kernel_params = (jnp.asarray(w_eff), b, bn_g, bn_b,
                     jnp.asarray(sel, jnp.bfloat16), pi)
    return raw, kernel_params


# -----------------------------------------------------------------------------
# NumPy reference (follows the PyTorch forward loop literally)
# -----------------------------------------------------------------------------
def reference_forward(x, mask, w, b, pi, gamma, depth):
    x = np.asarray(x, np.float32)
    xu = x @ np.asarray(mask)
    z = xu @ np.asarray(w) + np.asarray(b)
    mean = z.mean(0, keepdims=True)
    var = z.var(0, keepdims=True)  # biased, as in BN training mode
    zn = (z - mean) / np.sqrt(var + 1e-5)
    s = -2.0 / gamma ** 3 * zn ** 3 + 3.0 / (2.0 * gamma) * zn + 0.5
    s[zn <= -gamma / 2.0] = 0.0
    s[zn >= gamma / 2.0] = 1.0
    decisions = np.stack([s, 1.0 - s], axis=2)
    batch = x.shape[0]
    mu = np.ones((batch, 1, 1), np.float32)
    begin, end = 1, 2
    for level in range(depth):
        mu = mu.reshape(batch, -1, 1)
        mu = np.tile(mu, (1, 1, 2))
        mu = mu * decisions[:, begin:end, :]
        begin = end
        end = begin + 2 ** (level + 1)
    mu = mu.reshape(batch, 2 ** depth)
    probs = 1.0 / (1.0 + np.exp(-np.asarray(pi)))
    return mu @ probs


# -----------------------------------------------------------------------------
if __name__ == "__main__":
    n_features = 16
    n_classes = 2
    depth = 5
    used_features_rate = 0.7
    gamma = 0.1
    batch = 20   # deliberately not a tile multiple -> exercises padding

    raw, kp = build_params(n_features, n_classes, depth, used_features_rate,
                           seed=0)
    x = jax.random.normal(jax.random.PRNGKey(0), (batch, n_features),
                          dtype=jnp.float32)

    # Small block_rows so the demo exercises the multi-tile batch grid and the
    # padded tail tile; production default is 1024 rows (<= 2048 on v7x).
    out = neural_decision_tree_forward(x, kp, gamma=gamma, depth=depth,
                                       block_rows=8)
    out = jax.block_until_ready(out)

    ref = reference_forward(np.asarray(x), raw["mask"], raw["w"], raw["b"],
                            raw["pi"], gamma, depth)
    assert out.shape == ref.shape, (out.shape, ref.shape)
    # Routing / mixture dots run at bf16 MXU precision (f32 accumulation), so
    # the tolerance is bf16-scale; the decision path stays f32-accurate.
    np.testing.assert_allclose(np.asarray(out), ref, rtol=1e-2, atol=5e-3)

    print("KERNEL_OK")
</pallas_src>

<mosaic_0001>
module attributes {stable_mosaic.version = 11 : i64} {
  func.func @kernel(%arg0: i32, %arg1: memref<8x16xf32, #tpu.memory_space<vmem>>, %arg2: memref<16x72xf32, #tpu.memory_space<vmem>>, %arg3: memref<1x72xf32, #tpu.memory_space<vmem>>, %arg4: memref<72x256xbf16, #tpu.memory_space<vmem>>, %arg5: memref<128x1xf32, #tpu.memory_space<vmem>>, %arg6: memref<8x1xf32, #tpu.memory_space<vmem>>) attributes {dimension_semantics = [#tpu.dimension_semantics<parallel>], iteration_bounds = array<i64: 3>, scalar_prefetch = 0 : i64, scratch_operands = 0 : i64, tpu.core_type = #tpu.core_type<tc>, window_params = [{transform_indices = @transform_0, window_bounds = array<i64: 8, 16>}, {pipeline_mode = #tpu.pipeline_mode<synchronous>, transform_indices = @transform_1, window_bounds = array<i64: 16, 72>}, {pipeline_mode = #tpu.pipeline_mode<synchronous>, transform_indices = @transform_2, window_bounds = array<i64: 1, 72>}, {pipeline_mode = #tpu.pipeline_mode<synchronous>, transform_indices = @transform_3, window_bounds = array<i64: 72, 256>}, {pipeline_mode = #tpu.pipeline_mode<synchronous>, transform_indices = @transform_4, window_bounds = array<i64: 128, 1>}, {transform_indices = @transform_5, window_bounds = array<i64: 8, 1>}]} {
    %c0 = arith.constant 0 : index
    %c0_0 = arith.constant 0 : index
    %0 = vector.load %arg1[%c0, %c0_0] : memref<8x16xf32, #tpu.memory_space<vmem>>, vector<8x16xf32>
    %c0_1 = arith.constant 0 : index
    %c0_2 = arith.constant 0 : index
    %1 = vector.load %arg2[%c0_1, %c0_2] : memref<16x72xf32, #tpu.memory_space<vmem>>, vector<16x72xf32>
    %cst = arith.constant dense<0.000000e+00> : vector<8x72xf32>
    %2 = tpu.matmul %0, %1, %cst {dimension_numbers = #tpu.dot_dimension_numbers<[1], [0], [0], [1], [0, 0, 1, 1], [], []>, precision = #tpu.contract_precision<fp32>} : vector<8x16xf32>, vector<16x72xf32>, vector<8x72xf32> -> vector<8x72xf32>
    %c0_3 = arith.constant 0 : index
    %c0_4 = arith.constant 0 : index
    %3 = vector.load %arg3[%c0_3, %c0_4] : memref<1x72xf32, #tpu.memory_space<vmem>>, vector<1x72xf32>
    %4 = vector.broadcast %3 : vector<1x72xf32> to vector<8x72xf32>
    %5 = arith.addf %2, %4 : vector<8x72xf32>
    %cst_5 = arith.constant -2.000000e+03 : f32
    %6 = vector.broadcast %cst_5 : f32 to vector<8x72xf32>
    %7 = arith.mulf %6, %5 : vector<8x72xf32>
    %8 = arith.mulf %7, %5 : vector<8x72xf32>
    %9 = arith.mulf %8, %5 : vector<8x72xf32>
    %cst_6 = arith.constant 1.500000e+01 : f32
    %10 = vector.broadcast %cst_6 : f32 to vector<8x72xf32>
    %11 = arith.mulf %10, %5 : vector<8x72xf32>
    %12 = arith.addf %9, %11 : vector<8x72xf32>
    %cst_7 = arith.constant 5.000000e-01 : f32
    %13 = vector.broadcast %cst_7 : f32 to vector<8x72xf32>
    %14 = arith.addf %12, %13 : vector<8x72xf32>
    %cst_8 = arith.constant -5.000000e-02 : f32
    %15 = vector.broadcast %cst_8 : f32 to vector<8x72xf32>
    %16 = arith.cmpf ole, %5, %15 : vector<8x72xf32>
    %cst_9 = arith.constant 0.000000e+00 : f32
    %17 = vector.broadcast %cst_9 : f32 to vector<8x72xf32>
    %18 = arith.select %16, %17, %14 : vector<8x72xi1>, vector<8x72xf32>
    %cst_10 = arith.constant 5.000000e-02 : f32
    %19 = vector.broadcast %cst_10 : f32 to vector<8x72xf32>
    %20 = arith.cmpf oge, %5, %19 : vector<8x72xf32>
    %cst_11 = arith.constant 1.000000e+00 : f32
    %21 = vector.broadcast %cst_11 : f32 to vector<8x72xf32>
    %22 = arith.select %20, %21, %18 : vector<8x72xi1>, vector<8x72xf32>
    %23 = arith.truncf %22 : vector<8x72xf32> to vector<8x72xbf16>
    %c0_12 = arith.constant 0 : index
    %c0_13 = arith.constant 0 : index
    %24 = vector.load %arg4[%c0_12, %c0_13] : memref<72x256xbf16, #tpu.memory_space<vmem>>, vector<72x256xbf16>
    %cst_14 = arith.constant dense<0.000000e+00> : vector<8x256xf32>
    %25 = tpu.matmul %23, %24, %cst_14 {dimension_numbers = #tpu.dot_dimension_numbers<[1], [0], [0], [1], [0, 0, 1, 1], [], []>} : vector<8x72xbf16>, vector<72x256xbf16>, vector<8x256xf32> -> vector<8x256xf32>
    %26 = vector.extract_strided_slice %25 {offsets = [0, 0], sizes = [8, 128], strides = [1, 1]} : vector<8x256xf32> to vector<8x128xf32>
    %27 = vector.extract_strided_slice %25 {offsets = [0, 128], sizes = [8, 128], strides = [1, 1]} : vector<8x256xf32> to vector<8x128xf32>
    %28 = arith.mulf %26, %27 : vector<8x128xf32>
    %c64_i32 = arith.constant 64 : i32
    %29 = tpu.dynamic_rotate %28 by %c64_i32 dim 1 : vector<8x128xf32>, i32 -> vector<8x128xf32>
    %30 = arith.mulf %28, %29 : vector<8x128xf32>
    %c96_i32 = arith.constant 96 : i32
    %31 = tpu.dynamic_rotate %30 by %c96_i32 dim 1 : vector<8x128xf32>, i32 -> vector<8x128xf32>
    %32 = arith.mulf %30, %31 : vector<8x128xf32>
    %c0_15 = arith.constant 0 : index
    %c0_16 = arith.constant 0 : index
    %33 = vector.load %arg5[%c0_15, %c0_16] : memref<128x1xf32, #tpu.memory_space<vmem>>, vector<128x1xf32>
    %cst_17 = arith.constant dense<0.000000e+00> : vector<8x1xf32>
    %34 = tpu.matmul %32, %33, %cst_17 {dimension_numbers = #tpu.dot_dimension_numbers<[1], [0], [0], [1], [0, 0, 1, 1], [], []>} : vector<8x128xf32>, vector<128x1xf32>, vector<8x1xf32> -> vector<8x1xf32>
    %c0_18 = arith.constant 0 : index
    %c0_19 = arith.constant 0 : index
    %35 = vector.load %arg6[%c0_18, %c0_19] : memref<8x1xf32, #tpu.memory_space<vmem>>, vector<8x1xf32>
    tpu.vector_store %arg6[%c0_18, %c0_19], %34 {strides = array<i32>} : memref<8x1xf32, #tpu.memory_space<vmem>>, vector<8x1xf32>,
    return
  }
  func.func @transform_0(%arg0: i32) -> (i32, i32) {
    %c0_i32 = arith.constant 0 : i32
    %c0_i32_0 = arith.constant 0 : i32
    return %arg0, %c0_i32 : i32, i32
  }
  func.func @transform_1(%arg0: i32) -> (i32, i32) {
    %c0_i32 = arith.constant 0 : i32
    %c0_i32_0 = arith.constant 0 : i32
    %c0_i32_1 = arith.constant 0 : i32
    return %c0_i32, %c0_i32_0 : i32, i32
  }
  func.func @transform_2(%arg0: i32) -> (i32, i32) {
    %c0_i32 = arith.constant 0 : i32
    %c0_i32_0 = arith.constant 0 : i32
    %c0_i32_1 = arith.constant 0 : i32
    return %c0_i32, %c0_i32_0 : i32, i32
  }
  func.func @transform_3(%arg0: i32) -> (i32, i32) {
    %c0_i32 = arith.constant 0 : i32
    %c0_i32_0 = arith.constant 0 : i32
    %c0_i32_1 = arith.constant 0 : i32
    return %c0_i32, %c0_i32_0 : i32, i32
  }
  func.func @transform_4(%arg0: i32) -> (i32, i32) {
    %c0_i32 = arith.constant 0 : i32
    %c0_i32_0 = arith.constant 0 : i32
    %c0_i32_1 = arith.constant 0 : i32
    return %c0_i32, %c0_i32_0 : i32, i32
  }
  func.func @transform_5(%arg0: i32) -> (i32, i32) {
    %c0_i32 = arith.constant 0 : i32
    %c0_i32_0 = arith.constant 0 : i32
    return %arg0, %c0_i32 : i32, i32
  }
}

</mosaic_0001>

<llo_original>
// kernel: tpu_custom_call.1
$region0: #{tpu_custom_call.1}
  #allocation0 [shape = 'u32[]', space=smem, size = 0x4, offset = 0x4, fixed_abs, tag = 'smem constant byte address 0x4 - core index']
  #allocation1 [shape = 'u32[144,128]{1,0:T(1,128)}', space=vmem, size = 0x12000, scoped, tag = 'internal scratch']
  %s0 = inlined_call_operand.vmem [shape: f32[24,16], index: 0, kind: input, shape index: {}]
  %s1 = inlined_call_operand.vmem [shape: f32[16,72], index: 1, kind: input, shape index: {}]
  %s2 = inlined_call_operand.vmem [shape: f32[1,72], index: 2, kind: input, shape index: {}]
  %s3 = inlined_call_operand.vmem [shape: bf16[72,256], index: 3, kind: input, shape index: {}]
  %s4 = inlined_call_operand.vmem [shape: f32[128,1], index: 4, kind: input, shape index: {}]
  %s5 = inlined_call_operand.vmem [shape: f32[24,1], index: 5, kind: output, shape index: {}]
  %s6 = sld [smem:[#allocation0]]
  $region53: #{tpu_custom_call.1} parent=0
    _
  %s8 = ssub.s32 1, %s6
  %s9 = scalar_select 0, %s8, %s6
  loop: start=0, step=1, limit=5
  $region2: #{tpu_custom_call.1} parent=0 // loop_pre_header
    _
  $region3: #{tpu_custom_call.1} parent=0 // loop_header
    %s11 = sphi 0, %s15
    %p12 = scmp.ge.s32.totalorder %s11, 5
    %s21 = sphi 0, %s23
    %s24 = sphi 0, %s21
    %s25 = sphi 0, %s24
    %s41 = sphi 0, %s25
    %s45 = sphi 0, %s45
    %s47 = sphi 0, %s45
    %s48 = sphi 0, %s47
    %s62 = sphi 0, %s48
    %s66 = sphi 0, %s66
    %s68 = sphi 0, %s66
    %s69 = sphi 0, %s68
    %s83 = sphi 0, %s69
    %s87 = sphi 0, %s87
    %s89 = sphi 0, %s87
    %s90 = sphi 0, %s89
    %s104 = sphi 0, %s90
    %s108 = sphi 0, %s108
    %s110 = sphi 0, %s108
    %s111 = sphi 0, %s110
    %s125 = sphi 0, %s111
    %s131 = sphi 0, %s133
    %s134 = sphi 0, %s131
    %s135 = sphi 0, %s134
    %s151 = sphi 0, %s135
  $region4: #{tpu_custom_call.1} parent=0 // loop_header_branch
    %14 = sbr.rel (%p12) target = $region8
  $region5: #{tpu_custom_call.1} parent=0 // loop_body
    %s16 = ssub.s32 %s11, 1
    %s17 = ssub.s32 %s11, 2
    %s18 = sadd.s32 %s11, 1
    %s19 = ssub.s32 %s11, %s18
    %p20 = scmp.eq.s32.totalorder %s19, 0
    %s22 = sadd.s32 %s21, 1
    %s23 = scalar_select %p20, %s21, %s22
    %p26 = pneg %p20
    %p27 = scmp.eq.s32.totalorder %s11, 2
    %p28 = por %p26, %p27
    %p29 = scmp.ne.s32.totalorder %s21, %s24
    %p30 = scmp.eq.s32.totalorder %s11, 0
    %p31 = por %p29, %p30
    %p32 = scmp.ne.s32.totalorder %s21, %s24
    %p33 = scmp.eq.s32.totalorder %s16, 2
    %p34 = por %p32, %p33
    %p35 = scmp.ne.s32.totalorder %s24, %s25
    %p36 = scmp.eq.s32.totalorder %s16, 0
    %p37 = por %p35, %p36
    %p38 = scmp.ne.s32.totalorder %s24, %s25
    %p39 = scmp.eq.s32.totalorder %s17, 2
    %p40 = por %p38, %p39
    %p42 = scmp.ne.s32.totalorder %s25, %s41
    %p43 = scmp.eq.s32.totalorder %s17, 0
    %p44 = por %p42, %p43
    %s46 = sadd.s32 %s45, 1
    %p49 = scmp.eq.s32.totalorder %s11, 2
    %p50 = scmp.ne.s32.totalorder %s45, %s47
    %p51 = scmp.eq.s32.totalorder %s11, 0
    %p52 = por %p50, %p51
    %p53 = scmp.ne.s32.totalorder %s45, %s47
    %p54 = scmp.eq.s32.totalorder %s16, 2
    %p55 = por %p53, %p54
    %p56 = scmp.ne.s32.totalorder %s47, %s48
    %p57 = scmp.eq.s32.totalorder %s16, 0
    %p58 = por %p56, %p57
    %p59 = scmp.ne.s32.totalorder %s47, %s48
    %p60 = scmp.eq.s32.totalorder %s17, 2
    %p61 = por %p59, %p60
    %p63 = scmp.ne.s32.totalorder %s48, %s62
    %p64 = scmp.eq.s32.totalorder %s17, 0
    %p65 = por %p63, %p64
    %s67 = sadd.s32 %s66, 1
    %p70 = scmp.eq.s32.totalorder %s11, 2
    %p71 = scmp.ne.s32.totalorder %s66, %s68
    %p72 = scmp.eq.s32.totalorder %s11, 0
    %p73 = por %p71, %p72
    %p74 = scmp.ne.s32.totalorder %s66, %s68
    %p75 = scmp.eq.s32.totalorder %s16, 2
    %p76 = por %p74, %p75
    %p77 = scmp.ne.s32.totalorder %s68, %s69
    %p78 = scmp.eq.s32.totalorder %s16, 0
    %p79 = por %p77, %p78
    %p80 = scmp.ne.s32.totalorder %s68, %s69
    %p81 = scmp.eq.s32.totalorder %s17, 2
    %p82 = por %p80, %p81
    %p84 = scmp.ne.s32.totalorder %s69, %s83
    %p85 = scmp.eq.s32.totalorder %s17, 0
    %p86 = por %p84, %p85
    %s88 = sadd.s32 %s87, 1
    %p91 = scmp.eq.s32.totalorder %s11, 2
    %p92 = scmp.ne.s32.totalorder %s87, %s89
    %p93 = scmp.eq.s32.totalorder %s11, 0
    %p94 = por %p92, %p93
    %p95 = scmp.ne.s32.totalorder %s87, %s89
    %p96 = scmp.eq.s32.totalorder %s16, 2
    %p97 = por %p95, %p96
    %p98 = scmp.ne.s32.totalorder %s89, %s90
    %p99 = scmp.eq.s32.totalorder %s16, 0
    %p100 = por %p98, %p99
    %p101 = scmp.ne.s32.totalorder %s89, %s90
    %p102 = scmp.eq.s32.totalorder %s17, 2
    %p103 = por %p101, %p102
    %p105 = scmp.ne.s32.totalorder %s90, %s104
    %p106 = scmp.eq.s32.totalorder %s17, 0
    %p107 = por %p105, %p106
    %s109 = sadd.s32 %s108, 1
    %p112 = scmp.eq.s32.totalorder %s11, 2
    %p113 = scmp.ne.s32.totalorder %s108, %s110
    %p114 = scmp.eq.s32.totalorder %s11, 0
    %p115 = por %p113, %p114
    %p116 = scmp.ne.s32.totalorder %s108, %s110
    %p117 = scmp.eq.s32.totalorder %s16, 2
    %p118 = por %p116, %p117
    %p119 = scmp.ne.s32.totalorder %s110, %s111
    %p120 = scmp.eq.s32.totalorder %s16, 0
    %p121 = por %p119, %p120
    %p122 = scmp.ne.s32.totalorder %s110, %s111
    %p123 = scmp.eq.s32.totalorder %s17, 2
    %p124 = por %p122, %p123
    %p126 = scmp.ne.s32.totalorder %s111, %s125
    %p127 = scmp.eq.s32.totalorder %s17, 0
    %p128 = por %p126, %p127
    %s129 = ssub.s32 %s11, %s18
    %p130 = scmp.eq.s32.totalorder %s129, 0
    %s132 = sadd.s32 %s131, 1
    %s133 = scalar_select %p130, %s131, %s132
    %p136 = pneg %p130
    %p137 = scmp.eq.s32.totalorder %s11, 2
    %p138 = por %p136, %p137
    %p139 = scmp.ne.s32.totalorder %s131, %s134
    %p140 = scmp.eq.s32.totalorder %s11, 0
    %p141 = por %p139, %p140
    %p142 = scmp.ne.s32.totalorder %s131, %s134
    %p143 = scmp.eq.s32.totalorder %s16, 2
    %p144 = por %p142, %p143
    %p145 = scmp.ne.s32.totalorder %s134, %s135
    %p146 = scmp.eq.s32.totalorder %s16, 0
    %p147 = por %p145, %p146
    %p148 = scmp.ne.s32.totalorder %s134, %s135
    %p149 = scmp.eq.s32.totalorder %s17, 2
    %p150 = por %p148, %p149
    %p152 = scmp.ne.s32.totalorder %s135, %s151
    %p153 = scmp.eq.s32.totalorder %s17, 0
    %p154 = por %p152, %p153
    %p155 = scmp.le.s32.totalorder 1, %s11
    %p156 = scmp.lt.s32.totalorder %s11, 4
    %p157 = pnand %p155, %p156
    %p158 = pneg %p157
    // Predicated region
    $region9: #{tpu_custom_call.1} parent=5 // pred_check
      _
    $region10: #{tpu_custom_call.1} parent=5 // pred_check_branch
      %160 = sbr.rel (%p157) target = $region12
    $region11: #{tpu_custom_call.1} parent=5 // pred_region
      %s161 = ssub.s32 %s11, 1
      // Predicated region
      $region13: #{tpu_custom_call.1} parent=11 // pred_check
        %p162 = pneg %p58
      $region14: #{tpu_custom_call.1} parent=11 // pred_check_branch
        %164 = sbr.rel (%p162) target = $region16
      $region15: #{tpu_custom_call.1} parent=11 // pred_region
        _
      $region16: #{tpu_custom_call.1} parent=11 // pred_fallthru
        _
      // Predicated region
      $region17: #{tpu_custom_call.1} parent=11 // pred_check
        %p165 = pneg %p79
      $region18: #{tpu_custom_call.1} parent=11 // pred_check_branch
        %167 = sbr.rel (%p165) target = $region20
      $region19: #{tpu_custom_call.1} parent=11 // pred_region
        _
      $region20: #{tpu_custom_call.1} parent=11 // pred_fallthru
        _
      // Predicated region
      $region21: #{tpu_custom_call.1} parent=11 // pred_check
        %p168 = pneg %p100
      $region22: #{tpu_custom_call.1} parent=11 // pred_check_branch
        %170 = sbr.rel (%p168) target = $region24
      $region23: #{tpu_custom_call.1} parent=11 // pred_region
        _
      $region24: #{tpu_custom_call.1} parent=11 // pred_fallthru
        _
      // Predicated region
      $region25: #{tpu_custom_call.1} parent=11 // pred_check
        %p171 = pneg %p121
      $region26: #{tpu_custom_call.1} parent=11 // pred_check_branch
        %173 = sbr.rel (%p171) target = $region28
      $region27: #{tpu_custom_call.1} parent=11 // pred_region
        _
      $region28: #{tpu_custom_call.1} parent=11 // pred_fallthru
        _
    $region12: #{tpu_custom_call.1} parent=5 // pred_fallthru
      _
    %p174 = scmp.lt.s32.totalorder %s11, 3
    // Predicated region
    $region29: #{tpu_custom_call.1} parent=5 // pred_check
      %p175 = pneg %p174
    $region30: #{tpu_custom_call.1} parent=5 // pred_check_branch
      %177 = sbr.rel (%p175) target = $region32
    $region31: #{tpu_custom_call.1} parent=5 // pred_region
      // Predicated region
      $region33: #{tpu_custom_call.1} parent=31 // pred_check
        %p178 = pneg %p31
      $region34: #{tpu_custom_call.1} parent=31 // pred_check_branch
        %180 = sbr.rel (%p178) target = $region36
      $region35: #{tpu_custom_call.1} parent=31 // pred_region
        %p181 = scmp.lt.s32.totalorder %s11, 2
        %s182 = scalar_select %p181, %s11, 2
        %s183 = smul.addr %s182, 8
        %s184 = scalar_lea.vmem %s0, %s183
      $region36: #{tpu_custom_call.1} parent=31 // pred_fallthru
        _
    $region32: #{tpu_custom_call.1} parent=5 // pred_fallthru
      _
    %p185 = scmp.le.s32.totalorder 1, %s11
    %p186 = scmp.lt.s32.totalorder %s11, 4
    %p187 = pnand %p185, %p186
    %p188 = pneg %p187
    // Predicated region
    $region37: #{tpu_custom_call.1} parent=5 // pred_check
      _
    $region38: #{tpu_custom_call.1} parent=5 // pred_check_branch
      %190 = sbr.rel (%p187) target = $region40
    $region39: #{tpu_custom_call.1} parent=5 // pred_region
      %s191 = ssub.s32 %s11, 1
      %p192 = scmp.lt.s32.totalorder %s16, 2
      %s193 = scalar_select %p192, %s16, 2
      %s194 = smul.addr %s193, 8
      %s195 = scalar_lea.vmem %s0, %s194
      %p196 = pneg %p37
      %p197 = pneg %p34
      %p198 = pneg %p58
      %p199 = pneg %p55
      %p200 = pneg %p79
      %p201 = pneg %p76
      %p202 = pneg %p100
      %p203 = pneg %p97
      %p204 = pneg %p121
      %p205 = pneg %p118
      %p206 = pneg %p147
      %p207 = pneg %p144
      %p208 = scmp.lt.s32.totalorder %s16, 2
      %s209 = scalar_select %p208, %s16, 2
      %s210 = smul.addr %s209, 8
      %s211 = scalar_lea.vmem %s5, %s210
      %p212 = scmp.lt.s32.totalorder %s16, 2
      %s213 = scalar_select %p212, %s16, 2
      %s214 = smul.addr %s213, 8
      %s215 = scalar_lea.vmem %s0, %s214
      %p216 = scmp.lt.s32.totalorder %s16, 2
      %s217 = scalar_select %p216, %s16, 2
      %s218 = smul.addr %s217, 8
      %s219 = scalar_lea.vmem %s5, %s218
      %v221 = vld [vmem:[%s215] sm:$0xff]
      %v222 = vld [vmem:[%s1] sm:$0xff]
      %v223 = vld [vmem:[%s1 + $0x8] sm:$0xff]
      %v224 = vld [vmem:[%s2] sm:$0x1]
      %v226 = vlaneseq
      %v227 = vshrl.u32 %v226, 7
      %v228 = vsub.s32 0, %v227
      %v229 = vrot.slane %v224, %v228
      %vm231 = vcmask 130048
      %v233 = vsel %vm231, %v221, 0
      %235 = vmatprep.subr.mxu0 0.0
      %v236 = vand.u32 %v222, 4294901760
      %237 = vmatpush1.msra.mxu0 %v236
      %238 = vmatprep.subr.mxu0 0.0
      %v239 = vand.u32 %v223, 4294901760
      %240 = vmatpush1.msra.mxu0 %v239
      %241 = vmatprep.subr.mxu0 0.0
      %242 = vmatpush1.msra.mxu0 0.0
      %243 = vmatprep.subr.mxu0 0.0
      %244 = vmatpush1.msra.mxu0 0.0
      %245 = vmatprep.subr.mxu0 0.0
      %246 = vmatpush1.msra.mxu0 0.0
      %247 = vmatprep.subr.mxu0 0.0
      %248 = vmatpush1.msra.mxu0 0.0
      %249 = vmatprep.subr.mxu0 0.0
      %250 = vmatpush1.msra.mxu0 0.0
      %251 = vmatprep.subr.mxu0 0.0
      %252 = vmatpush1.msra.mxu0 0.0
      %253 = vmatprep.subr.mxu0 0.0
      %254 = vmatpush1.msra.mxu0 0.0
      %255 = vmatprep.subr.mxu0 0.0
      %256 = vmatpush1.msra.mxu0 0.0
      %257 = vmatprep.subr.mxu0 0.0
      %258 = vmatpush1.msra.mxu0 0.0
      %259 = vmatprep.subr.mxu0 0.0
      %260 = vmatpush1.msra.mxu0 0.0
      %261 = vmatprep.subr.mxu0 0.0
      %262 = vmatpush1.msra.mxu0 0.0
      %263 = vmatprep.subr.mxu0 0.0
      %264 = vmatpush1.msra.mxu0 0.0
      %265 = vmatprep.subr.mxu0 0.0
      %266 = vmatpush1.msra.mxu0 0.0
      %267 = vmatprep.subr.mxu0 0.0
      %268 = vmatpush1.msra.mxu0 0.0
      %269 = vmatprep.subr.mxu0 0.0
      %270 = vmatpush1.msra.mxu0 0.0
      %271 = vmatprep.subr.mxu0 0.0
      %272 = vmatpush1.msra.mxu0 0.0
      %273 = vmatprep.subr.mxu0 0.0
      %274 = vmatpush1.msra.mxu0 0.0
      %275 = vmatprep.subr.mxu0 0.0
      %276 = vmatpush1.msra.mxu0 0.0
      %277 = vmatprep.subr.mxu0 0.0
      %278 = vmatpush1.msra.mxu0 0.0
      %279 = vmatprep.subr.mxu0 0.0
      %280 = vmatpush1.msra.mxu0 0.0
      %281 = vmatprep.subr.mxu0 0.0
      %282 = vmatpush1.msra.mxu0 0.0
      %283 = vmatprep.subr.mxu0 0.0
      %284 = vmatpush1.msra.mxu0 0.0
      %285 = vmatprep.subr.mxu0 0.0
      %286 = vmatpush1.msra.mxu0 0.0
      %287 = vmatprep.subr.mxu0 0.0
      %288 = vmatpush1.msra.mxu0 0.0
      %289 = vmatprep.subr.mxu0 0.0
      %290 = vmatpush1.msra.mxu0 0.0
      %291 = vmatprep.subr.mxu0 0.0
      %292 = vmatpush1.msra.mxu0 0.0
      %293 = vmatprep.subr.mxu0 0.0
      %294 = vmatpush1.msra.mxu0 0.0
      %295 = vmatprep.subr.mxu0 0.0
      %296 = vmatpush1.msra.mxu0 0.0
      %297 = vmatprep.subr.mxu0 0.0
      %298 = vmatpush1.msra.mxu0 0.0
      %299 = vmatprep.subr.mxu0 0.0
      %300 = vmatpush1.msra.mxu0 0.0
      %301 = vmatprep.mubr.f32.mxu0 0.0
      %v302 = vand.u32 %v233, 4294901760
      %v303 = vsub.f32 %v233, %v302
      %v304 = vand.u32 %v303, 4294901760
      %v305 = vsub.f32 %v303, %v304
      %v306 = vand.u32 %v305, 4294901760
      %307 = vmatmul.mubr.f32.gmra.mrb[0].mxu0 %v306
      %v308 = vpop.f32.mrb[0].mxu0
      %v309 = vadd.f32 %v229, %v308
      %v310 = vpop.f32.mrb[0].mxu0
      %311 = vdwg.mxu0
      %312 = vmatprep.subr.mxu0 0.0
      %v313 = vand.u32 %v222, 4294901760
      %v314 = vsub.f32 %v222, %v313
      %v315 = vand.u32 %v314, 4294901760
      %v316 = vsub.f32 %v314, %v315
      %v317 = vand.u32 %v316, 4294901760
      %318 = vmatpush1.msra.mxu0 %v317
      %319 = vmatprep.subr.mxu0 0.0
      %v320 = vand.u32 %v223, 4294901760
      %v321 = vsub.f32 %v223, %v320
      %v322 = vand.u32 %v321, 4294901760
      %v323 = vsub.f32 %v321, %v322
      %v324 = vand.u32 %v323, 4294901760
      %325 = vmatpush1.msra.mxu0 %v324
      %326 = vmatprep.subr.mxu0 0.0
      %327 = vmatpush1.msra.mxu0 0.0
      %328 = vmatprep.subr.mxu0 0.0
      %329 = vmatpush1.msra.mxu0 0.0
      %330 = vmatprep.subr.mxu0 0.0
      %331 = vmatpush1.msra.mxu0 0.0
      %332 = vmatprep.subr.mxu0 0.0
      %333 = vmatpush1.msra.mxu0 0.0
      %334 = vmatprep.subr.mxu0 0.0
      %335 = vmatpush1.msra.mxu0 0.0
      %336 = vmatprep.subr.mxu0 0.0
      %337 = vmatpush1.msra.mxu0 0.0
      %338 = vmatprep.subr.mxu0 0.0
      %339 = vmatpush1.msra.mxu0 0.0
      %340 = vmatprep.subr.mxu0 0.0
      %341 = vmatpush1.msra.mxu0 0.0
      %342 = vmatprep.subr.mxu0 0.0
      %343 = vmatpush1.msra.mxu0 0.0
      %344 = vmatprep.subr.mxu0 0.0
      %345 = vmatpush1.msra.mxu0 0.0
      %346 = vmatprep.subr.mxu0 0.0
      %347 = vmatpush1.msra.mxu0 0.0
      %348 = vmatprep.subr.mxu0 0.0
      %349 = vmatpush1.msra.mxu0 0.0
      %350 = vmatprep.subr.mxu0 0.0
      %351 = vmatpush1.msra.mxu0 0.0
      %352 = vmatprep.subr.mxu0 0.0
      %353 = vmatpush1.msra.mxu0 0.0
      %354 = vmatprep.subr.mxu0 0.0
      %355 = vmatpush1.msra.mxu0 0.0
      %356 = vmatprep.subr.mxu0 0.0
      %357 = vmatpush1.msra.mxu0 0.0
      %358 = vmatprep.subr.mxu0 0.0
      %359 = vmatpush1.msra.mxu0 0.0
      %360 = vmatprep.subr.mxu0 0.0
      %361 = vmatpush1.msra.mxu0 0.0
      %362 = vmatprep.subr.mxu0 0.0
      %363 = vmatpush1.msra.mxu0 0.0
      %364 = vmatprep.subr.mxu0 0.0
      %365 = vmatpush1.msra.mxu0 0.0
      %366 = vmatprep.subr.mxu0 0.0
      %367 = vmatpush1.msra.mxu0 0.0
      %368 = vmatprep.subr.mxu0 0.0
      %369 = vmatpush1.msra.mxu0 0.0
      %370 = vmatprep.subr.mxu0 0.0
      %371 = vmatpush1.msra.mxu0 0.0
      %372 = vmatprep.subr.mxu0 0.0
      %373 = vmatpush1.msra.mxu0 0.0
      %374 = vmatprep.subr.mxu0 0.0
      %375 = vmatpush1.msra.mxu0 0.0
      %376 = vmatprep.subr.mxu0 0.0
      %377 = vmatpush1.msra.mxu0 0.0
      %378 = vmatprep.subr.mxu0 0.0
      %379 = vmatpush1.msra.mxu0 0.0
      %380 = vmatprep.subr.mxu0 0.0
      %381 = vmatpush1.msra.mxu0 0.0
      %382 = vmatprep.subr.mxu0 0.0
      %383 = vmatpush1.msra.mxu0 0.0
      %384 = vmatprep.subr.mxu0 0.0
      %385 = vmatpush1.msra.mxu0 0.0
      %386 = vmatprep.mubr.f32.mxu0 0.0
      %v387 = vand.u32 %v233, 4294901760
      %388 = vmatmul.mubr.f32.gmra.mrb[0].mxu0 %v387
      %v389 = vpop.f32.mrb[0].mxu0
      %v390 = vadd.f32 %v309, %v389
      %v391 = vpop.f32.mrb[0].mxu0
      %392 = vdwg.mxu0
      %393 = vmatprep.subr.mxu0 0.0
      %v394 = vand.u32 %v222, 4294901760
      %v395 = vsub.f32 %v222, %v394
      %396 = vmatpush1.msra.mxu0 %v395
      %397 = vmatprep.subr.mxu0 0.0
      %v398 = vand.u32 %v223, 4294901760
      %v399 = vsub.f32 %v223, %v398
      %400 = vmatpush1.msra.mxu0 %v399
      %401 = vmatprep.subr.mxu0 0.0
      %402 = vmatpush1.msra.mxu0 0.0
      %403 = vmatprep.subr.mxu0 0.0
      %404 = vmatpush1.msra.mxu0 0.0
      %405 = vmatprep.subr.mxu0 0.0
      %406 = vmatpush1.msra.mxu0 0.0
      %407 = vmatprep.subr.mxu0 0.0
      %408 = vmatpush1.msra.mxu0 0.0
      %409 = vmatprep.subr.mxu0 0.0
      %410 = vmatpush1.msra.mxu0 0.0
      %411 = vmatprep.subr.mxu0 0.0
      %412 = vmatpush1.msra.mxu0 0.0
      %413 = vmatprep.subr.mxu0 0.0
      %414 = vmatpush1.msra.mxu0 0.0
      %415 = vmatprep.subr.mxu0 0.0
      %416 = vmatpush1.msra.mxu0 0.0
      %417 = vmatprep.subr.mxu0 0.0
      %418 = vmatpush1.msra.mxu0 0.0
      %419 = vmatprep.subr.mxu0 0.0
      %420 = vmatpush1.msra.mxu0 0.0
      %421 = vmatprep.subr.mxu0 0.0
      %422 = vmatpush1.msra.mxu0 0.0
      %423 = vmatprep.subr.mxu0 0.0
      %424 = vmatpush1.msra.mxu0 0.0
      %425 = vmatprep.subr.mxu0 0.0
      %426 = vmatpush1.msra.mxu0 0.0
      %427 = vmatprep.subr.mxu0 0.0
      %428 = vmatpush1.msra.mxu0 0.0
      %429 = vmatprep.subr.mxu0 0.0
      %430 = vmatpush1.msra.mxu0 0.0
      %431 = vmatprep.subr.mxu0 0.0
      %432 = vmatpush1.msra.mxu0 0.0
      %433 = vmatprep.subr.mxu0 0.0
      %434 = vmatpush1.msra.mxu0 0.0
      %435 = vmatprep.subr.mxu0 0.0
      %436 = vmatpush1.msra.mxu0 0.0
      %437 = vmatprep.subr.mxu0 0.0
      %438 = vmatpush1.msra.mxu0 0.0
      %439 = vmatprep.subr.mxu0 0.0
      %440 = vmatpush1.msra.mxu0 0.0
      %441 = vmatprep.subr.mxu0 0.0
      %442 = vmatpush1.msra.mxu0 0.0
      %443 = vmatprep.subr.mxu0 0.0
      %444 = vmatpush1.msra.mxu0 0.0
      %445 = vmatprep.subr.mxu0 0.0
      %446 = vmatpush1.msra.mxu0 0.0
      %447 = vmatprep.subr.mxu0 0.0
      %448 = vmatpush1.msra.mxu0 0.0
      %449 = vmatprep.subr.mxu0 0.0
      %450 = vmatpush1.msra.mxu0 0.0
      %451 = vmatprep.subr.mxu0 0.0
      %452 = vmatpush1.msra.mxu0 0.0
      %453 = vmatprep.subr.mxu0 0.0
      %454 = vmatpush1.msra.mxu0 0.0
      %455 = vmatprep.subr.mxu0 0.0
      %456 = vmatpush1.msra.mxu0 0.0
      %457 = vmatprep.subr.mxu0 0.0
      %458 = vmatpush1.msra.mxu0 0.0
      %459 = vmatprep.subr.mxu0 0.0
      %460 = vmatpush1.msra.mxu0 0.0
      %461 = vmatprep.mubr.f32.mxu0 0.0
      %v462 = vand.u32 %v233, 4294901760
      %v463 = vsub.f32 %v233, %v462
      %464 = vmatmul.mubr.f32.gmra.mrb[0].mxu0 %v463
      %v465 = vpop.f32.mrb[0].mxu0
      %v466 = vadd.f32 %v390, %v465
      %v467 = vpop.f32.mrb[0].mxu0
      %468 = vdwg.mxu0
      %469 = vmatprep.subr.mxu0 0.0
      %v470 = vand.u32 %v222, 4294901760
      %471 = vmatpush1.msra.mxu0 %v470
      %472 = vmatprep.subr.mxu0 0.0
      %v473 = vand.u32 %v223, 4294901760
      %474 = vmatpush1.msra.mxu0 %v473
      %475 = vmatprep.subr.mxu0 0.0
      %476 = vmatpush1.msra.mxu0 0.0
      %477 = vmatprep.subr.mxu0 0.0
      %478 = vmatpush1.msra.mxu0 0.0
      %479 = vmatprep.subr.mxu0 0.0
      %480 = vmatpush1.msra.mxu0 0.0
      %481 = vmatprep.subr.mxu0 0.0
      %482 = vmatpush1.msra.mxu0 0.0
      %483 = vmatprep.subr.mxu0 0.0
      %484 = vmatpush1.msra.mxu0 0.0
      %485 = vmatprep.subr.mxu0 0.0
      %486 = vmatpush1.msra.mxu0 0.0
      %487 = vmatprep.subr.mxu0 0.0
      %488 = vmatpush1.msra.mxu0 0.0
      %489 = vmatprep.subr.mxu0 0.0
      %490 = vmatpush1.msra.mxu0 0.0
      %491 = vmatprep.subr.mxu0 0.0
      %492 = vmatpush1.msra.mxu0 0.0
      %493 = vmatprep.subr.mxu0 0.0
      %494 = vmatpush1.msra.mxu0 0.0
      %495 = vmatprep.subr.mxu0 0.0
      %496 = vmatpush1.msra.mxu0 0.0
      %497 = vmatprep.subr.mxu0 0.0
      %498 = vmatpush1.msra.mxu0 0.0
      %499 = vmatprep.subr.mxu0 0.0
      %500 = vmatpush1.msra.mxu0 0.0
      %501 = vmatprep.subr.mxu0 0.0
      %502 = vmatpush1.msra.mxu0 0.0
      %503 = vmatprep.subr.mxu0 0.0
      %504 = vmatpush1.msra.mxu0 0.0
      %505 = vmatprep.subr.mxu0 0.0
      %506 = vmatpush1.msra.mxu0 0.0
      %507 = vmatprep.subr.mxu0 0.0
      %508 = vmatpush1.msra.mxu0 0.0
      %509 = vmatprep.subr.mxu0 0.0
      %510 = vmatpush1.msra.mxu0 0.0
      %511 = vmatprep.subr.mxu0 0.0
      %512 = vmatpush1.msra.mxu0 0.0
      %513 = vmatprep.subr.mxu0 0.0
      %514 = vmatpush1.msra.mxu0 0.0
      %515 = vmatprep.subr.mxu0 0.0
      %516 = vmatpush1.msra.mxu0 0.0
      %517 = vmatprep.subr.mxu0 0.0
      %518 = vmatpush1.msra.mxu0 0.0
      %519 = vmatprep.subr.mxu0 0.0
      %520 = vmatpush1.msra.mxu0 0.0
      %521 = vmatprep.subr.mxu0 0.0
      %522 = vmatpush1.msra.mxu0 0.0
      %523 = vmatprep.subr.mxu0 0.0
      %524 = vmatpush1.msra.mxu0 0.0
      %525 = vmatprep.subr.mxu0 0.0
      %526 = vmatpush1.msra.mxu0 0.0
      %527 = vmatprep.subr.mxu0 0.0
      %528 = vmatpush1.msra.mxu0 0.0
      %529 = vmatprep.subr.mxu0 0.0
      %530 = vmatpush1.msra.mxu0 0.0
      %531 = vmatprep.subr.mxu0 0.0
      %532 = vmatpush1.msra.mxu0 0.0
      %533 = vmatprep.subr.mxu0 0.0
      %534 = vmatpush1.msra.mxu0 0.0
      %535 = vmatprep.mubr.f32.mxu0 0.0
      %v536 = vand.u32 %v233, 4294901760
      %v537 = vsub.f32 %v233, %v536
      %v538 = vand.u32 %v537, 4294901760
      %539 = vmatmul.mubr.f32.gmra.mrb[0].mxu0 %v538
      %v540 = vpop.f32.mrb[0].mxu0
      %v541 = vadd.f32 %v466, %v540
      %v542 = vpop.f32.mrb[0].mxu0
      %543 = vdwg.mxu0
      %544 = vmatprep.subr.mxu0 0.0
      %v545 = vand.u32 %v222, 4294901760
      %v546 = vsub.f32 %v222, %v545
      %v547 = vand.u32 %v546, 4294901760
      %548 = vmatpush1.msra.mxu0 %v547
      %549 = vmatprep.subr.mxu0 0.0
      %v550 = vand.u32 %v223, 4294901760
      %v551 = vsub.f32 %v223, %v550
      %v552 = vand.u32 %v551, 4294901760
      %553 = vmatpush1.msra.mxu0 %v552
      %554 = vmatprep.subr.mxu0 0.0
      %555 = vmatpush1.msra.mxu0 0.0
      %556 = vmatprep.subr.mxu0 0.0
      %557 = vmatpush1.msra.mxu0 0.0
      %558 = vmatprep.subr.mxu0 0.0
      %559 = vmatpush1.msra.mxu0 0.0
      %560 = vmatprep.subr.mxu0 0.0
      %561 = vmatpush1.msra.mxu0 0.0
      %562 = vmatprep.subr.mxu0 0.0
      %563 = vmatpush1.msra.mxu0 0.0
      %564 = vmatprep.subr.mxu0 0.0
      %565 = vmatpush1.msra.mxu0 0.0
      %566 = vmatprep.subr.mxu0 0.0
      %567 = vmatpush1.msra.mxu0 0.0
      %568 = vmatprep.subr.mxu0 0.0
      %569 = vmatpush1.msra.mxu0 0.0
      %570 = vmatprep.subr.mxu0 0.0
      %571 = vmatpush1.msra.mxu0 0.0
      %572 = vmatprep.subr.mxu0 0.0
      %573 = vmatpush1.msra.mxu0 0.0
      %574 = vmatprep.subr.mxu0 0.0
      %575 = vmatpush1.msra.mxu0 0.0
      %576 = vmatprep.subr.mxu0 0.0
      %577 = vmatpush1.msra.mxu0 0.0
      %578 = vmatprep.subr.mxu0 0.0
      %579 = vmatpush1.msra.mxu0 0.0
      %580 = vmatprep.subr.mxu0 0.0
      %581 = vmatpush1.msra.mxu0 0.0
      %582 = vmatprep.subr.mxu0 0.0
      %583 = vmatpush1.msra.mxu0 0.0
      %584 = vmatprep.subr.mxu0 0.0
      %585 = vmatpush1.msra.mxu0 0.0
      %586 = vmatprep.subr.mxu0 0.0
      %587 = vmatpush1.msra.mxu0 0.0
      %588 = vmatprep.subr.mxu0 0.0
      %589 = vmatpush1.msra.mxu0 0.0
      %590 = vmatprep.subr.mxu0 0.0
      %591 = vmatpush1.msra.mxu0 0.0
      %592 = vmatprep.subr.mxu0 0.0
      %593 = vmatpush1.msra.mxu0 0.0
      %594 = vmatprep.subr.mxu0 0.0
      %595 = vmatpush1.msra.mxu0 0.0
      %596 = vmatprep.subr.mxu0 0.0
      %597 = vmatpush1.msra.mxu0 0.0
      %598 = vmatprep.subr.mxu0 0.0
      %599 = vmatpush1.msra.mxu0 0.0
      %600 = vmatprep.subr.mxu0 0.0
      %601 = vmatpush1.msra.mxu0 0.0
      %602 = vmatprep.subr.mxu0 0.0
      %603 = vmatpush1.msra.mxu0 0.0
      %604 = vmatprep.subr.mxu0 0.0
      %605 = vmatpush1.msra.mxu0 0.0
      %606 = vmatprep.subr.mxu0 0.0
      %607 = vmatpush1.msra.mxu0 0.0
      %608 = vmatprep.subr.mxu0 0.0
      %609 = vmatpush1.msra.mxu0 0.0
      %610 = vmatprep.subr.mxu0 0.0
      %611 = vmatpush1.msra.mxu0 0.0
      %612 = vmatprep.subr.mxu0 0.0
      %613 = vmatpush1.msra.mxu0 0.0
      %614 = vmatprep.mubr.f32.mxu0 0.0
      %v615 = vand.u32 %v233, 4294901760
      %616 = vmatmul.mubr.f32.gmra.mrb[0].mxu0 %v615
      %v617 = vpop.f32.mrb[0].mxu0
      %v618 = vadd.f32 %v541, %v617
      %v619 = vpop.f32.mrb[0].mxu0
      %620 = vdwg.mxu0
      %621 = vmatprep.subr.mxu0 0.0
      %v622 = vand.u32 %v222, 4294901760
      %623 = vmatpush1.msra.mxu0 %v622
      %624 = vmatprep.subr.mxu0 0.0
      %v625 = vand.u32 %v223, 4294901760
      %626 = vmatpush1.msra.mxu0 %v625
      %627 = vmatprep.subr.mxu0 0.0
      %628 = vmatpush1.msra.mxu0 0.0
      %629 = vmatprep.subr.mxu0 0.0
      %630 = vmatpush1.msra.mxu0 0.0
      %631 = vmatprep.subr.mxu0 0.0
      %632 = vmatpush1.msra.mxu0 0.0
      %633 = vmatprep.subr.mxu0 0.0
      %634 = vmatpush1.msra.mxu0 0.0
      %635 = vmatprep.subr.mxu0 0.0
      %636 = vmatpush1.msra.mxu0 0.0
      %637 = vmatprep.subr.mxu0 0.0
      %638 = vmatpush1.msra.mxu0 0.0
      %639 = vmatprep.subr.mxu0 0.0
      %640 = vmatpush1.msra.mxu0 0.0
      %641 = vmatprep.subr.mxu0 0.0
      %642 = vmatpush1.msra.mxu0 0.0
      %643 = vmatprep.subr.mxu0 0.0
      %644 = vmatpush1.msra.mxu0 0.0
      %645 = vmatprep.subr.mxu0 0.0
      %646 = vmatpush1.msra.mxu0 0.0
      %647 = vmatprep.subr.mxu0 0.0
      %648 = vmatpush1.msra.mxu0 0.0
      %649 = vmatprep.subr.mxu0 0.0
      %650 = vmatpush1.msra.mxu0 0.0
      %651 = vmatprep.subr.mxu0 0.0
      %652 = vmatpush1.msra.mxu0 0.0
      %653 = vmatprep.subr.mxu0 0.0
      %654 = vmatpush1.msra.mxu0 0.0
      %655 = vmatprep.subr.mxu0 0.0
      %656 = vmatpush1.msra.mxu0 0.0
      %657 = vmatprep.subr.mxu0 0.0
      %658 = vmatpush1.msra.mxu0 0.0
      %659 = vmatprep.subr.mxu0 0.0
      %660 = vmatpush1.msra.mxu0 0.0
      %661 = vmatprep.subr.mxu0 0.0
      %662 = vmatpush1.msra.mxu0 0.0
      %663 = vmatprep.subr.mxu0 0.0
      %664 = vmatpush1.msra.mxu0 0.0
      %665 = vmatprep.subr.mxu0 0.0
      %666 = vmatpush1.msra.mxu0 0.0
      %667 = vmatprep.subr.mxu0 0.0
      %668 = vmatpush1.msra.mxu0 0.0
      %669 = vmatprep.subr.mxu0 0.0
      %670 = vmatpush1.msra.mxu0 0.0
      %671 = vmatprep.subr.mxu0 0.0
      %672 = vmatpush1.msra.mxu0 0.0
      %673 = vmatprep.subr.mxu0 0.0
      %674 = vmatpush1.msra.mxu0 0.0
      %675 = vmatprep.subr.mxu0 0.0
      %676 = vmatpush1.msra.mxu0 0.0
      %677 = vmatprep.subr.mxu0 0.0
      %678 = vmatpush1.msra.mxu0 0.0
      %679 = vmatprep.subr.mxu0 0.0
      %680 = vmatpush1.msra.mxu0 0.0
      %681 = vmatprep.subr.mxu0 0.0
      %682 = vmatpush1.msra.mxu0 0.0
      %683 = vmatprep.subr.mxu0 0.0
      %684 = vmatpush1.msra.mxu0 0.0
      %685 = vmatprep.subr.mxu0 0.0
      %686 = vmatpush1.msra.mxu0 0.0
      %687 = vmatprep.mubr.f32.mxu0 0.0
      %v688 = vand.u32 %v233, 4294901760
      %689 = vmatmul.mubr.f32.gmra.mrb[0].mxu0 %v688
      %v690 = vpop.f32.mrb[0].mxu0
      %v691 = vadd.f32 %v618, %v690
      %v692 = vpop.f32.mrb[0].mxu0
      %693 = vdwg.mxu0
      %v694 = vmul.f32 %v691, -2000.0
      %v695 = vmul.f32 %v694, %v691
      %v696 = vmul.f32 %v695, %v691
      %v697 = vmul.f32 %v691, 15.0
      %v698 = vadd.f32 %v696, %v697
      %v699 = vadd.f32 %v698, 0.5
      %vm700 = vcmp.le.f32.partialorder %v691, -0.05
      %v701 = vsel %vm700, 0.0, %v699
      %vm702 = vcmp.ge.f32.partialorder %v691, 0.05
      %v703 = vsel %vm702, 1.0, %v701
      %v704 = vpack.c.bf16 %v703, %v703
      %v705 = vld [vmem:[%s3] sm:$0xff]
      %v706 = vld [vmem:[%s3 + $0x8] sm:$0xff]
      %v707 = vld [vmem:[%s3 + $0x10] sm:$0xff]
      %v708 = vld [vmem:[%s3 + $0x18] sm:$0xff]
      %v709 = vld [vmem:[%s3 + $0x20] sm:$0xff]
      %v710 = vld [vmem:[%s3 + $0x28] sm:$0xff]
      %v711 = vld [vmem:[%s3 + $0x30] sm:$0xff]
      %v712 = vld [vmem:[%s3 + $0x38] sm:$0xff]
      %v713 = vld [vmem:[%s3 + $0x40] sm:$0xff]
      %v723 = vunpack.c.l.b16 %v705
      %v724 = vunpack.c.h.b16 %v705
      %v725 = vunpack.c.l.b16 %v706
      %v726 = vunpack.c.h.b16 %v706
      %v727 = vunpack.c.l.b16 %v707
      %v728 = vunpack.c.h.b16 %v707
      %v729 = vunpack.c.l.b16 %v708
      %v730 = vunpack.c.h.b16 %v708
      %v731 = vunpack.c.l.b16 %v709
      %v732 = vunpack.c.h.b16 %v709
      %v733 = vunpack.c.l.b16 %v710
      %v734 = vunpack.c.h.b16 %v710
      %v735 = vunpack.c.l.b16 %v711
      %v736 = vunpack.c.h.b16 %v711
      %v737 = vunpack.c.l.b16 %v712
      %v738 = vunpack.c.h.b16 %v712
      %v739 = vunpack.c.l.b16 %v713
      %v740 = vunpack.c.h.b16 %v713
      %v741 = vpack.c.b16 %v725, %v723
      %v742 = vpack.c.b16 %v726, %v724
      %v743 = vpack.c.b16 %v729, %v727
      %v744 = vpack.c.b16 %v730, %v728
      %v745 = vpack.c.b16 %v733, %v731
      %v746 = vpack.c.b16 %v734, %v732
      %v747 = vpack.c.b16 %v737, %v735
      %v748 = vpack.c.b16 %v738, %v736
      %v749 = vpack.c.b16 %v739, %v739
      %v750 = vpack.c.b16 %v740, %v740
      %vm759 = vcmask 588800
      %v761 = vsel %vm759, %v704, 0
      %vm763 = vcmask 1043456
      %v765 = vsel %vm763, %v749, 0
      %v768 = vsel %vm763, %v750, 0
      %770 = vmatprep.subr.bf16.mxu0 %v742
      %771 = vmatpush1.bf16.msra.mxu0 %v741
      %772 = vmatprep.subr.bf16.mxu0 %v744
      %773 = vmatpush1.bf16.msra.mxu0 %v743
      %774 = vmatprep.subr.bf16.mxu0 %v746
      %775 = vmatpush1.bf16.msra.mxu0 %v745
      %776 = vmatprep.subr.bf16.mxu0 %v748
      %777 = vmatpush1.bf16.msra.mxu0 %v747
      %778 = vmatprep.subr.bf16.mxu0 %v768
      %779 = vmatpush1.bf16.msra.mxu0 %v765
      %780 = vmatprep.subr.bf16.mxu0 0
      %781 = vmatpush1.bf16.msra.mxu0 0
      %782 = vmatprep.subr.bf16.mxu0 0
      %783 = vmatpush1.bf16.msra.mxu0 0
      %784 = vmatprep.subr.bf16.mxu0 0
      %785 = vmatpush1.bf16.msra.mxu0 0
      %786 = vmatprep.subr.bf16.mxu0 0
      %787 = vmatpush1.bf16.msra.mxu0 0
      %788 = vmatprep.subr.bf16.mxu0 0
      %789 = vmatpush1.bf16.msra.mxu0 0
      %790 = vmatprep.subr.bf16.mxu0 0
      %791 = vmatpush1.bf16.msra.mxu0 0
      %792 = vmatprep.subr.bf16.mxu0 0
      %793 = vmatpush1.bf16.msra.mxu0 0
      %794 = vmatprep.subr.bf16.mxu0 0
      %795 = vmatpush1.bf16.msra.mxu0 0
      %796 = vmatprep.subr.bf16.mxu0 0
      %797 = vmatpush1.bf16.msra.mxu0 0
      %798 = vmatprep.subr.bf16.mxu0 0
      %799 = vmatpush1.bf16.msra.mxu0 0
      %800 = vmatprep.subr.bf16.mxu0 0
      %801 = vmatpush1.bf16.msra.mxu0 0
      %802 = vmatprep.mubr.bf16.mxu0 0
      %803 = vmatmul.mubr.bf16.gmra.mrb[0].mxu0 %v761
      %v804 = vpop.f32.mrb[0].mxu0
      %v805 = vadd.f32 0.0, %v804
      %v806 = vpop.f32.mrb[0].mxu0
      %v807 = vadd.f32 0.0, %v806
      %v808 = vpop.f32.mrb[0].mxu0
      %v809 = vpop.f32.mrb[0].mxu0
      %810 = vdwg.mxu0
      %v811 = vmul.f32 %v805, %v807
      %812 = vrot.lane.b32.xlu0 %v811, 64
      %v813 = vpop.permute.xlu0 %812
      %v814 = vmul.f32 %v811, %v813
      %815 = vrot.lane.b32.xlu0 %v814, 96
      %v816 = vpop.permute.xlu0 %815
      %v817 = vmul.f32 %v814, %v816
      %v818 = vld [vmem:[%s4] sm:$0xff]
      %v819 = vld [vmem:[%s4 + $0x8] sm:$0xff]
      %v820 = vld [vmem:[%s4 + $0x10] sm:$0xff]
      %v821 = vld [vmem:[%s4 + $0x18] sm:$0xff]
      %v822 = vld [vmem:[%s4 + $0x20] sm:$0xff]
      %v823 = vld [vmem:[%s4 + $0x28] sm:$0xff]
      %v824 = vld [vmem:[%s4 + $0x30] sm:$0xff]
      %v825 = vld [vmem:[%s4 + $0x38] sm:$0xff]
      %v826 = vld [vmem:[%s4 + $0x40] sm:$0xff]
      %v827 = vld [vmem:[%s4 + $0x48] sm:$0xff]
      %v828 = vld [vmem:[%s4 + $0x50] sm:$0xff]
      %v829 = vld [vmem:[%s4 + $0x58] sm:$0xff]
      %v830 = vld [vmem:[%s4 + $0x60] sm:$0xff]
      %v831 = vld [vmem:[%s4 + $0x68] sm:$0xff]
      %v832 = vld [vmem:[%s4 + $0x70] sm:$0xff]
      %v833 = vld [vmem:[%s4 + $0x78] sm:$0xff]
      %834 = vmatprep.subr.mxu0 0.0
      %835 = vmatpush1.msra.mxu0 %v818
      %836 = vmatprep.subr.mxu0 0.0
      %837 = vmatpush1.msra.mxu0 %v819
      %838 = vmatprep.subr.mxu0 0.0
      %839 = vmatpush1.msra.mxu0 %v820
      %840 = vmatprep.subr.mxu0 0.0
      %841 = vmatpush1.msra.mxu0 %v821
      %842 = vmatprep.subr.mxu0 0.0
      %843 = vmatpush1.msra.mxu0 %v822
      %844 = vmatprep.subr.mxu0 0.0
      %845 = vmatpush1.msra.mxu0 %v823
      %846 = vmatprep.subr.mxu0 0.0
      %847 = vmatpush1.msra.mxu0 %v824
      %848 = vmatprep.subr.mxu0 0.0
      %849 = vmatpush1.msra.mxu0 %v825
      %850 = vmatprep.subr.mxu0 0.0
      %851 = vmatpush1.msra.mxu0 %v826
      %852 = vmatprep.subr.mxu0 0.0
      %853 = vmatpush1.msra.mxu0 %v827
      %854 = vmatprep.subr.mxu0 0.0
      %855 = vmatpush1.msra.mxu0 %v828
      %856 = vmatprep.subr.mxu0 0.0
      %857 = vmatpush1.msra.mxu0 %v829
      %858 = vmatprep.subr.mxu0 0.0
      %859 = vmatpush1.msra.mxu0 %v830
      %860 = vmatprep.subr.mxu0 0.0
      %861 = vmatpush1.msra.mxu0 %v831
      %862 = vmatprep.subr.mxu0 0.0
      %863 = vmatpush1.msra.mxu0 %v832
      %864 = vmatprep.subr.mxu0 0.0
      %865 = vmatpush1.msra.mxu0 %v833
      %866 = vmatprep.subr.mxu0 0.0
      %867 = vmatpush1.msra.mxu0 0.0
      %868 = vmatprep.subr.mxu0 0.0
      %869 = vmatpush1.msra.mxu0 0.0
      %870 = vmatprep.subr.mxu0 0.0
      %871 = vmatpush1.msra.mxu0 0.0
      %872 = vmatprep.subr.mxu0 0.0
      %873 = vmatpush1.msra.mxu0 0.0
      %874 = vmatprep.subr.mxu0 0.0
      %875 = vmatpush1.msra.mxu0 0.0
      %876 = vmatprep.subr.mxu0 0.0
      %877 = vmatpush1.msra.mxu0 0.0
      %878 = vmatprep.subr.mxu0 0.0
      %879 = vmatpush1.msra.mxu0 0.0
      %880 = vmatprep.subr.mxu0 0.0
      %881 = vmatpush1.msra.mxu0 0.0
      %882 = vmatprep.subr.mxu0 0.0
      %883 = vmatpush1.msra.mxu0 0.0
      %884 = vmatprep.subr.mxu0 0.0
      %885 = vmatpush1.msra.mxu0 0.0
      %886 = vmatprep.subr.mxu0 0.0
      %887 = vmatpush1.msra.mxu0 0.0
      %888 = vmatprep.subr.mxu0 0.0
      %889 = vmatpush1.msra.mxu0 0.0
      %890 = vmatprep.subr.mxu0 0.0
      %891 = vmatpush1.msra.mxu0 0.0
      %892 = vmatprep.subr.mxu0 0.0
      %893 = vmatpush1.msra.mxu0 0.0
      %894 = vmatprep.subr.mxu0 0.0
      %895 = vmatpush1.msra.mxu0 0.0
      %896 = vmatprep.subr.mxu0 0.0
      %897 = vmatpush1.msra.mxu0 0.0
      %898 = vmatprep.mubr.f32.mxu0 0.0
      %899 = vmatmul.mubr.f32.gmra.mrb[0].mxu0 %v817
      %v900 = vpop.f32.mrb[0].mxu0
      %v901 = vadd.f32 0.0, %v900
      %v902 = vpop.f32.mrb[0].mxu0
      %903 = vdwg.mxu0
      %vm904 = vcmask 7168
      %905 = vst.msk [vmem:[%s219] sm:$0xff] %vm904, %v901
      %p906 = scmp.lt.s32.totalorder %s16, 2
      %s907 = scalar_select %p906, %s16, 2
      %s908 = smul.addr %s907, 8
      %s909 = scalar_lea.vmem %s5, %s908
      // Predicated region
      $region41: #{tpu_custom_call.1} parent=39 // pred_check
        %p910 = pneg %p144
      $region42: #{tpu_custom_call.1} parent=39 // pred_check_branch
        %912 = sbr.rel (%p910) target = $region44
      $region43: #{tpu_custom_call.1} parent=39 // pred_region
        _
      $region44: #{tpu_custom_call.1} parent=39 // pred_fallthru
        _
    $region40: #{tpu_custom_call.1} parent=5 // pred_fallthru
      _
    %p913 = scmp.le.s32.totalorder 2, %s11
    // Predicated region
    $region45: #{tpu_custom_call.1} parent=5 // pred_check
      %p914 = pneg %p913
    $region46: #{tpu_custom_call.1} parent=5 // pred_check_branch
      %916 = sbr.rel (%p914) target = $region48
    $region47: #{tpu_custom_call.1} parent=5 // pred_region
      %s917 = ssub.s32 %s11, 2
      // Predicated region
      $region49: #{tpu_custom_call.1} parent=47 // pred_check
        %p918 = pneg %p150
      $region50: #{tpu_custom_call.1} parent=47 // pred_check_branch
        %920 = sbr.rel (%p918) target = $region52
      $region51: #{tpu_custom_call.1} parent=47 // pred_region
        %p921 = scmp.lt.s32.totalorder %s17, 2
        %s922 = scalar_select %p921, %s17, 2
        %s923 = smul.addr %s922, 8
        %s924 = scalar_lea.vmem %s5, %s923
      $region52: #{tpu_custom_call.1} parent=47 // pred_fallthru
        _
    $region48: #{tpu_custom_call.1} parent=5 // pred_fallthru
      _
  $region6: #{tpu_custom_call.1} parent=0 // loop_footer
    %s15 = sadd.s32 1, %s11
  $region7: #{tpu_custom_call.1} parent=0 // loop_footer_branch
    %10 = sbr.rel target = $region3
  $region8: #{tpu_custom_call.1} parent=0 // loop_exit
    _

</llo_original>
